<compile_context>
chip_gen: v7x
topology: tpu7x:2x2x1
jax: 0.10.0
libtpu: 0.0.40
codegen_flags: <defaults>
</compile_context>

<pallas_src>
from functools import partial

import jax
import jax.numpy as jnp
from jax.experimental import pallas as pl
from jax.experimental.pallas import tpu as pltpu

LANE = 128  # TPU lane width; pad the batch (lane) axis to a multiple of this.


def mlp_kernel(x_ref, params_ref, b2_ref, o_ref, *, h):
    """Forward pass of Net with batch on the lane axis.

    x_ref      : (1, Npad)  input, batch along lanes (zero-padded to 128k)
    params_ref : (3*H, 1)   packed [w1; b1; w2] columns (single VMEM DMA)
    b2_ref     : (1, 1)     output bias, SMEM scalar
    o_ref      : (1, Npad)  output, batch along lanes (unmasked full-width vst)
    """
    x = x_ref[...]                       # (1, Npad)
    w1 = params_ref[0:h, :]              # (H, 1)  8-aligned static sublane slice
    b1 = params_ref[h:2 * h, :]          # (H, 1)
    w2 = params_ref[2 * h:3 * h, :]      # (H, 1)

    # Linear(1 -> H): outer product via VPU broadcast; bias + ReLU fused.
    hidden = jnp.maximum(w1 * x + b1, 0.0)                      # (H, Npad)
    # Linear(H -> 1): weighted reduction over the hidden (sublane) axis via
    # the XLU (different VLIW slot than the VPU multiplies); SMEM scalar bias.
    o = jnp.sum(w2 * hidden, axis=0, keepdims=True) + b2_ref[0, 0]  # (1, Npad)
    o_ref[...] = o.astype(o_ref.dtype)


@partial(jax.jit, static_argnames=("n", "h"))
def net_forward(x_lane, params, b2_s, n, h):
    """Pallas forward pass; padding-slice + (N,1) reshape stay inside the jit."""
    n_pad = x_lane.shape[1]
    out_lane = pl.pallas_call(
        partial(mlp_kernel, h=h),
        out_shape=jax.ShapeDtypeStruct((1, n_pad), x_lane.dtype),
        grid=(),
        in_specs=[
            pl.BlockSpec((1, n_pad), lambda: (0, 0)),      # x, lane-dense
            pl.BlockSpec((3 * h, 1), lambda: (0, 0)),      # packed w1|b1|w2
            pl.BlockSpec(memory_space=pltpu.SMEM),         # b2 scalar in SMEM
        ],
        out_specs=pl.BlockSpec((1, n_pad), lambda: (0, 0)),
    )(x_lane, params, b2_s)
    # Drop the zero-padded lanes and return in PyTorch (N, 1) convention.
    return out_lane[:, :n].reshape(n, 1)


def to_kernel_layout(x, w1, b1, w2, b2):
    """One-time conversion from PyTorch nn.Linear layout to kernel layout.

    Done OUTSIDE the jitted hot path so the pallas_call is the only op on the
    critical path.
    x  : (N, 1)  -> (1, Npad)   batch on lanes, zero-padded to 128-multiple
    w1 : (H, 1) \
    b1 : (H,)    -> (3*H, 1)    packed parameter slab (one DMA)
    w2 : (1, H) /
    b2 : (1,)    -> (1, 1)      SMEM scalar
    """
    n, f = x.shape
    assert f == 1, "kernel is specialized for n_feature=1 (matches the PyTorch script)"
    h = w1.shape[0]
    assert w2.shape[0] == 1, "kernel is specialized for n_output=1 (matches the PyTorch script)"

    n_pad = ((n + LANE - 1) // LANE) * LANE
    # Zero padding keeps the padded lanes finite through ReLU/sum; they are
    # sliced off inside net_forward before anyone sees them.
    x_lane = jnp.zeros((1, n_pad), x.dtype).at[0, :n].set(x[:, 0])

    params = jnp.concatenate(
        [w1.reshape(h, 1), b1.reshape(h, 1), w2.reshape(h, 1)], axis=0
    ).astype(jnp.float32)                                   # (3*H, 1)
    b2_s = b2.reshape(1, 1).astype(jnp.float32)             # (1, 1) -> SMEM
    return x_lane, params, b2_s, n, h


def init_linear(key, out_features, in_features):
    """Deterministic init mimicking torch.nn.Linear default (uniform +/- 1/sqrt(fan_in))."""
    k_w, k_b = jax.random.split(key)
    bound = 1.0 / jnp.sqrt(in_features)
    w = jax.random.uniform(k_w, (out_features, in_features),
                           minval=-bound, maxval=bound, dtype=jnp.float32)
    b = jax.random.uniform(k_b, (out_features,),
                           minval=-bound, maxval=bound, dtype=jnp.float32)
    return w, b


if __name__ == "__main__":
    n_feature, n_hidden, n_output = 1, 32, 1
    batch = 100  # matches torch.linspace(-1, 1, 100).unsqueeze(1)

    key = jax.random.PRNGKey(0)
    k1, k2 = jax.random.split(key)
    w1, b1 = init_linear(k1, n_hidden, n_feature)   # (32, 1), (32,)
    w2, b2 = init_linear(k2, n_output, n_hidden)    # (1, 32), (1,)

    # Input: same as the PyTorch script's x, in PyTorch (N, 1) convention.
    x = jnp.expand_dims(jnp.linspace(-1.0, 1.0, batch, dtype=jnp.float32), axis=1)

    # One-time layout conversion, then the lane-dense Pallas forward.
    x_lane, params, b2_s, n, h = to_kernel_layout(x, w1, b1, w2, b2)
    out = jax.block_until_ready(net_forward(x_lane, params, b2_s, n, h))   # (N, 1)

    # Reference check in plain JAX (PyTorch layout/semantics).
    ref = jnp.maximum(x @ w1.T + b1, 0.0) @ w2.T + b2
    assert out.shape == (batch, n_output)
    assert jnp.allclose(out, ref, atol=1e-5, rtol=1e-5)

    print("KERNEL_OK")
</pallas_src>

<mosaic_0001>
module attributes {stable_mosaic.version = 11 : i64} {
  func.func @mlp_kernel(%arg0: memref<1x128xf32, #tpu.memory_space<vmem>>, %arg1: memref<96x1xf32, #tpu.memory_space<vmem>>, %arg2: memref<1x1xf32, #tpu.memory_space<smem>>, %arg3: memref<1x128xf32, #tpu.memory_space<vmem>>) attributes {dimension_semantics = [], scalar_prefetch = 0 : i64, scratch_operands = 0 : i64, tpu.core_type = #tpu.core_type<tc>} {
    %c0 = arith.constant 0 : index
    %c0_0 = arith.constant 0 : index
    %0 = vector.load %arg0[%c0, %c0_0] : memref<1x128xf32, #tpu.memory_space<vmem>>, vector<1x128xf32>
    %c0_1 = arith.constant 0 : index
    %c0_2 = arith.constant 0 : index
    %1 = vector.load %arg1[%c0_1, %c0_2] : memref<96x1xf32, #tpu.memory_space<vmem>>, vector<32x1xf32>
    %c32 = arith.constant 32 : index
    %c0_3 = arith.constant 0 : index
    %2 = vector.load %arg1[%c32, %c0_3] : memref<96x1xf32, #tpu.memory_space<vmem>>, vector<32x1xf32>
    %c64 = arith.constant 64 : index
    %c0_4 = arith.constant 0 : index
    %3 = vector.load %arg1[%c64, %c0_4] : memref<96x1xf32, #tpu.memory_space<vmem>>, vector<32x1xf32>
    %4 = vector.broadcast %1 : vector<32x1xf32> to vector<32x128xf32>
    %5 = vector.broadcast %0 : vector<1x128xf32> to vector<32x128xf32>
    %6 = arith.mulf %4, %5 : vector<32x128xf32>
    %7 = vector.broadcast %2 : vector<32x1xf32> to vector<32x128xf32>
    %8 = arith.addf %6, %7 : vector<32x128xf32>
    %cst = arith.constant 0.000000e+00 : f32
    %9 = vector.broadcast %cst : f32 to vector<32x128xf32>
    %10 = arith.maximumf %8, %9 : vector<32x128xf32>
    %11 = vector.broadcast %3 : vector<32x1xf32> to vector<32x128xf32>
    %12 = arith.mulf %11, %10 : vector<32x128xf32>
    %cst_5 = arith.constant dense<0.000000e+00> : vector<128xf32>
    %13 = vector.multi_reduction <add>, %12, %cst_5 [0] : vector<32x128xf32> to vector<128xf32>
    %14 = vector.shape_cast %13 : vector<128xf32> to vector<1x128xf32>
    %c0_6 = arith.constant 0 : index
    %c0_7 = arith.constant 0 : index
    %15 = memref.load %arg2[%c0_6, %c0_7] : memref<1x1xf32, #tpu.memory_space<smem>>
    %16 = vector.broadcast %15 : f32 to vector<1x128xf32>
    %17 = arith.addf %14, %16 : vector<1x128xf32>
    %c0_8 = arith.constant 0 : index
    %c0_9 = arith.constant 0 : index
    %18 = vector.load %arg3[%c0_8, %c0_9] : memref<1x128xf32, #tpu.memory_space<vmem>>, vector<1x128xf32>
    tpu.vector_store %arg3[%c0_8, %c0_9], %17 {strides = array<i32>} : memref<1x128xf32, #tpu.memory_space<vmem>>, vector<1x128xf32>,
    return
  }
}

</mosaic_0001>

<llo_original>
// kernel: net_forward.1
$region0: #{net_forward.1}
  #allocation0 [shape = 'u32[]', space=smem, size = 0x4, offset = 0x4, fixed_abs, tag = 'smem constant byte address 0x4 - core index']
  #allocation1 [shape = 'u32[144,128]{1,0:T(1,128)}', space=vmem, size = 0x12000, scoped, tag = 'internal scratch']
  #allocation2 [shape = 'f32[1,1]{1,0:T(1,128)S(6)}', space=smem, size = 0x200, scoped, tag = 'scoped memory for net_forward.1']
  %s0 = inlined_call_operand.vmem [shape: f32[1,128], index: 0, kind: input, shape index: {}]
  %s1 = inlined_call_operand.vmem [shape: f32[96,1], index: 1, kind: input, shape index: {}]
  %s2 = inlined_call_operand.<no memory space> [shape: f32[1,1], index: 2, kind: input, shape index: {}]
  %s3 = inlined_call_operand.vmem [shape: f32[1,128], index: 3, kind: output, shape index: {}]
  %s4 = sld [smem:[#allocation0]]
  $region22: #{net_forward.1} parent=0
    _
  %s6 = ssub.s32 1, %s4
  %s7 = scalar_select 0, %s6, %s4
  %8 = sst [smem:[#allocation2]] %s2
  // Predicated region
  $region2: #{net_forward.1} parent=0 // pred_check
    _
  $region3: #{net_forward.1} parent=0 // pred_check_branch
    %10 = sbr.rel (0) target = $region5
  $region4: #{net_forward.1} parent=0 // pred_region
    _
  $region5: #{net_forward.1} parent=0 // pred_fallthru
    _
  // Predicated region
  $region6: #{net_forward.1} parent=0 // pred_check
    _
  $region7: #{net_forward.1} parent=0 // pred_check_branch
    %12 = sbr.rel (0) target = $region9
  $region8: #{net_forward.1} parent=0 // pred_region
    _
  $region9: #{net_forward.1} parent=0 // pred_fallthru
    _
  // Predicated region
  $region10: #{net_forward.1} parent=0 // pred_check
    _
  $region11: #{net_forward.1} parent=0 // pred_check_branch
    %14 = sbr.rel (0) target = $region13
  $region12: #{net_forward.1} parent=0 // pred_region
    _
  $region13: #{net_forward.1} parent=0 // pred_fallthru
    _
  %v15 = vld [vmem:[%s0] sm:$0x1]
  %v16 = vld [vmem:[%s1] sm:$0xff]
  %v17 = vld [vmem:[%s1 + $0x8] sm:$0xff]
  %v18 = vld [vmem:[%s1 + $0x10] sm:$0xff]
  %v19 = vld [vmem:[%s1 + $0x18] sm:$0xff]
  %v20 = vld [vmem:[%s1 + $0x20] sm:$0xff]
  %v21 = vld [vmem:[%s1 + $0x28] sm:$0xff]
  %v22 = vld [vmem:[%s1 + $0x30] sm:$0xff]
  %v23 = vld [vmem:[%s1 + $0x38] sm:$0xff]
  %v24 = vld [vmem:[%s1 + $0x40] sm:$0xff]
  %v25 = vld [vmem:[%s1 + $0x48] sm:$0xff]
  %v26 = vld [vmem:[%s1 + $0x50] sm:$0xff]
  %v27 = vld [vmem:[%s1 + $0x58] sm:$0xff]
  %29 = vset.pattern.permute.xlu0 0
  %30 = vperm.xlu0 %29, %v16
  %v31 = vpop.permute.xlu0 %30
  %34 = vset.pattern.permute.xlu0 0
  %35 = vperm.xlu0 %34, %v17
  %v36 = vpop.permute.xlu0 %35
  %39 = vset.pattern.permute.xlu0 0
  %40 = vperm.xlu0 %39, %v18
  %v41 = vpop.permute.xlu0 %40
  %44 = vset.pattern.permute.xlu0 0
  %45 = vperm.xlu0 %44, %v19
  %v46 = vpop.permute.xlu0 %45
  %v49 = vlaneseq
  %v50 = vshrl.u32 %v49, 7
  %v51 = vsub.s32 0, %v50
  %v52 = vrot.slane %v15, %v51
  %v54 = vmul.f32 %v31, %v52
  %v55 = vmul.f32 %v36, %v52
  %v56 = vmul.f32 %v41, %v52
  %v57 = vmul.f32 %v46, %v52
  %59 = vset.pattern.permute.xlu0 0
  %60 = vperm.xlu0 %59, %v20
  %v61 = vpop.permute.xlu0 %60
  %64 = vset.pattern.permute.xlu0 0
  %65 = vperm.xlu0 %64, %v21
  %v66 = vpop.permute.xlu0 %65
  %69 = vset.pattern.permute.xlu0 0
  %70 = vperm.xlu0 %69, %v22
  %v71 = vpop.permute.xlu0 %70
  %74 = vset.pattern.permute.xlu0 0
  %75 = vperm.xlu0 %74, %v23
  %v76 = vpop.permute.xlu0 %75
  %v78 = vadd.f32 %v54, %v61
  %v79 = vadd.f32 %v55, %v66
  %v80 = vadd.f32 %v56, %v71
  %v81 = vadd.f32 %v57, %v76
  %v82 = vmax.f32 %v78, 0.0
  %v83 = vmax.f32 %v79, 0.0
  %v84 = vmax.f32 %v80, 0.0
  %v85 = vmax.f32 %v81, 0.0
  %87 = vset.pattern.permute.xlu0 0
  %88 = vperm.xlu0 %87, %v24
  %v89 = vpop.permute.xlu0 %88
  %92 = vset.pattern.permute.xlu0 0
  %93 = vperm.xlu0 %92, %v25
  %v94 = vpop.permute.xlu0 %93
  %97 = vset.pattern.permute.xlu0 0
  %98 = vperm.xlu0 %97, %v26
  %v99 = vpop.permute.xlu0 %98
  %102 = vset.pattern.permute.xlu0 0
  %103 = vperm.xlu0 %102, %v27
  %v104 = vpop.permute.xlu0 %103
  %v106 = vmul.f32 %v89, %v82
  %v107 = vmul.f32 %v94, %v83
  %v108 = vmul.f32 %v99, %v84
  %v109 = vmul.f32 %v104, %v85
  %v110 = vadd.f32 %v106, %v107
  %v111 = vadd.f32 %v110, %v108
  %v112 = vadd.f32 %v111, %v109
  %v113 = vrot.slane %v112, 4
  %v114 = vadd.f32 %v112, %v113
  %v115 = vrot.slane %v114, 2
  %v116 = vadd.f32 %v114, %v115
  %v117 = vrot.slane %v116, 1
  %v118 = vadd.f32 %v116, %v117
  %s119 = sld [smem:[#allocation2]]
  %v120 = vstv %s119
  %v121 = vadd.f32 %v118, %v120
  %122 = vst [vmem:[%s3] sm:$0x1] %v121
  // Predicated region
  $region14: #{net_forward.1} parent=0 // pred_check
    _
  $region15: #{net_forward.1} parent=0 // pred_check_branch
    %124 = sbr.rel (0) target = $region17
  $region16: #{net_forward.1} parent=0 // pred_region
    _
  $region17: #{net_forward.1} parent=0 // pred_fallthru
    _
  // Predicated region
  $region18: #{net_forward.1} parent=0 // pred_check
    _
  $region19: #{net_forward.1} parent=0 // pred_check_branch
    %126 = sbr.rel (0) target = $region21
  $region20: #{net_forward.1} parent=0 // pred_region
    _
  $region21: #{net_forward.1} parent=0 // pred_fallthru
    _

</llo_original>
